<compile_context>
chip_gen: v6e
topology: v6e:2x2x1
jax: 0.10.0
libtpu: 0.0.40
codegen_flags: <defaults>
</compile_context>

<pallas_src>
import functools

import jax
import jax.numpy as jnp
import numpy as np
from jax.experimental import pallas as pl
from jax.experimental.pallas import tpu as pltpu


def _segment_max_broadcast(vals, ids, num_segments):
    """== torch.index_select(tg.nn.global_max_pool(vals, ids), 0, ids).

    Unrolled over the small, static segment count. The same per-segment mask
    is used for both the masked max and the broadcast-back (pure VPU selects,
    no one-hot matmul). Empty segments never reach the output because no node
    carries their id.
    """
    pool = jnp.zeros_like(vals)
    for s in range(num_segments):
        m = ids == s                                                   # (N, 1) bool
        seg = jnp.max(jnp.where(m, vals, -jnp.inf), axis=0, keepdims=True)  # (1, C)
        pool = jnp.where(m, seg, pool)                                 # broadcast back
    return pool


def mixpool_kernel(x_ref, w_ref, b_ref, g_ref, be_ref,
                   stroke_ref, batch_ref, out_ref,
                   *, c_out, num_batch, num_stroke, eps, matmul_dtype):
    x = x_ref[...]
    w = w_ref[...]
    if matmul_dtype != jnp.float32:
        # bf16 operands, f32 accumulation: ~2x MXU throughput on v6e/v7x.
        x = x.astype(matmul_dtype)
        w = w.astype(matmul_dtype)

    # Fused Linear for both branches: (N, C_in) x (C_in, 2*C_out).
    y = jnp.dot(x, w, preferred_element_type=jnp.float32) + b_ref[...]

    # BatchNorm1d (training-mode batch stats) + ReLU, single stats pass.
    n = y.shape[0]
    inv_n = jnp.float32(1.0 / n)
    s1 = jnp.sum(y, axis=0, keepdims=True)
    s2 = jnp.sum(y * y, axis=0, keepdims=True)
    mean = s1 * inv_n
    var = jnp.maximum(s2 * inv_n - mean * mean, 0.0)     # biased var, guard cancellation
    scale = g_ref[...] * jax.lax.rsqrt(var + eps)
    shift = be_ref[...] - mean * scale
    y = jnp.maximum(y * scale + shift, 0.0)              # ReLU

    # Static, 128-lane-aligned split: [:, :c_out] = sketch branch, [:, c_out:] = max branch.
    y_sk = y[:, :c_out]
    y_max = y[:, c_out:]

    # Segment max + broadcast; two static lane-aligned stores (no concat temp).
    out_ref[:, :c_out] = _segment_max_broadcast(y_sk, stroke_ref[...], num_stroke)
    out_ref[:, c_out:] = _segment_max_broadcast(y_max, batch_ref[...], num_batch)


def mixpool(x, params, batch_ids, stroke_ids, num_batch, num_stroke,
            eps=1e-5, matmul_dtype=jnp.float32):
    n, c_in = x.shape
    c_out = params["w_max"].shape[1]

    # Fuse the two branches' parameters once in the wrapper (tiny arrays):
    # layout is [sketch | max] along the channel axis to match the output concat.
    w = jnp.concatenate([params["w_sk"], params["w_max"]], axis=1)      # (C_in, 2C)
    b = jnp.concatenate([params["b_sk"], params["b_max"]], axis=1)      # (1, 2C)
    g = jnp.concatenate([params["g_sk"], params["g_max"]], axis=1)      # (1, 2C)
    be = jnp.concatenate([params["beta_sk"], params["beta_max"]], axis=1)

    vmem = pl.BlockSpec(memory_space=pltpu.MemorySpace.VMEM)  # whole-array blocks, no grid
    kernel = functools.partial(mixpool_kernel, c_out=c_out, num_batch=num_batch,
                               num_stroke=num_stroke, eps=eps,
                               matmul_dtype=matmul_dtype)

    # Size the scoped VMEM limit from the problem (x, y, out, ids, params + headroom);
    # matters on v5e (16 MiB default) / v6e (32 MiB default) once N grows.
    est = 4 * n * (c_in + 6 * c_out + 2) + 4 * (c_in + 4) * 2 * c_out + (4 << 20)
    vmem_limit = int(min(max(est, 32 << 20), 64 << 20))

    out = pl.pallas_call(
        kernel,
        out_shape=jax.ShapeDtypeStruct((n, 2 * c_out), jnp.float32),
        in_specs=[vmem] * 7,
        out_specs=vmem,
        compiler_params=pltpu.CompilerParams(vmem_limit_bytes=vmem_limit),
    )(x, w, b, g, be,
      stroke_ids.reshape(n, 1).astype(jnp.int32),
      batch_ids.reshape(n, 1).astype(jnp.int32))

    # pool_max / pool_sketch are cheap lane-aligned views of the single kernel
    # output (avoids writing the same N*2C floats to HBM twice in the kernel).
    return out, out[:, c_out:], out[:, :c_out]


def mixpool_reference(x, params, batch_ids, stroke_ids, num_batch, num_stroke, eps=1e-5):
    """Pure-JAX reference of the PyTorch forward (train-mode BatchNorm)."""
    def branch(w, b, g, be):
        y = x @ w + b
        mean = y.mean(0, keepdims=True)
        var = ((y - mean) ** 2).mean(0, keepdims=True)
        return jnp.maximum((y - mean) / jnp.sqrt(var + eps) * g + be, 0.0)

    y_max = branch(params["w_max"], params["b_max"], params["g_max"], params["beta_max"])
    y_sk = branch(params["w_sk"], params["b_sk"], params["g_sk"], params["beta_sk"])
    pm = jax.ops.segment_max(y_max, batch_ids, num_segments=num_batch)[batch_ids]
    ps = jax.ops.segment_max(y_sk, stroke_ids, num_segments=num_stroke)[stroke_ids]
    return jnp.concatenate([ps, pm], axis=1), pm, ps


if __name__ == "__main__":
    key = jax.random.PRNGKey(0)
    B, N_PER, C_IN, C_OUT, N_STROKES = 2, 16, 16, 128, 8
    N = B * N_PER  # total nodes ((BxN) x F layout of the PyTorch module)

    k = jax.random.split(key, 5)
    bound = 1.0 / np.sqrt(C_IN)  # PyTorch Linear default init bound
    # Linear weights stored as (Cin, Cout) == W^T of torch's (Cout, Cin).
    params = {
        "w_max": jax.random.uniform(k[0], (C_IN, C_OUT), jnp.float32, -bound, bound),
        "b_max": jax.random.uniform(k[1], (1, C_OUT), jnp.float32, -bound, bound),
        "g_max": jnp.ones((1, C_OUT), jnp.float32),      # BatchNorm1d weight
        "beta_max": jnp.zeros((1, C_OUT), jnp.float32),  # BatchNorm1d bias
        "w_sk": jax.random.uniform(k[2], (C_IN, C_OUT), jnp.float32, -bound, bound),
        "b_sk": jax.random.uniform(k[3], (1, C_OUT), jnp.float32, -bound, bound),
        "g_sk": jnp.ones((1, C_OUT), jnp.float32),
        "beta_sk": jnp.zeros((1, C_OUT), jnp.float32),
    }

    x = jax.random.normal(k[4], (N, C_IN), jnp.float32)
    batch_ids = jnp.repeat(jnp.arange(B, dtype=jnp.int32), N_PER)        # graph id per node
    stroke_ids = jnp.arange(N, dtype=jnp.int32) // (N // N_STROKES)      # stroke id per node

    ref = mixpool_reference(x, params, batch_ids, stroke_ids, B, N_STROKES)

    # 1) f32 matmul path: exact semantics, tight tolerance.
    out = mixpool(x, params, batch_ids, stroke_ids, B, N_STROKES)
    out = jax.block_until_ready(out)
    for got, want in zip(out, ref):
        np.testing.assert_allclose(np.asarray(got), np.asarray(want), atol=1e-4, rtol=1e-4)

    # 2) bf16-operand matmul path (v6e/v7x MXU optimization): loose tolerance
    #    consistent with bf16 operand rounding; BN renormalizes immediately.
    out_bf16 = mixpool(x, params, batch_ids, stroke_ids, B, N_STROKES,
                       matmul_dtype=jnp.bfloat16)
    out_bf16 = jax.block_until_ready(out_bf16)
    for got, want in zip(out_bf16, ref):
        np.testing.assert_allclose(np.asarray(got), np.asarray(want), atol=5e-2, rtol=5e-2)

    print("KERNEL_OK")
</pallas_src>

<mosaic_0001>
module attributes {stable_mosaic.version = 11 : i64} {
  func.func @mixpool_kernel(%arg0: memref<32x16xf32, #tpu.memory_space<vmem>>, %arg1: memref<16x256xf32, #tpu.memory_space<vmem>>, %arg2: memref<1x256xf32, #tpu.memory_space<vmem>>, %arg3: memref<1x256xf32, #tpu.memory_space<vmem>>, %arg4: memref<1x256xf32, #tpu.memory_space<vmem>>, %arg5: memref<32x1xi32, #tpu.memory_space<vmem>>, %arg6: memref<32x1xi32, #tpu.memory_space<vmem>>, %arg7: memref<32x256xf32, #tpu.memory_space<vmem>>) attributes {dimension_semantics = [], scalar_prefetch = 0 : i64, scratch_operands = 0 : i64, tpu.core_type = #tpu.core_type<tc>} {
    %c0 = arith.constant 0 : index
    %c0_0 = arith.constant 0 : index
    %0 = vector.load %arg0[%c0, %c0_0] : memref<32x16xf32, #tpu.memory_space<vmem>>, vector<32x16xf32>
    %c0_1 = arith.constant 0 : index
    %c0_2 = arith.constant 0 : index
    %1 = vector.load %arg1[%c0_1, %c0_2] : memref<16x256xf32, #tpu.memory_space<vmem>>, vector<16x256xf32>
    %cst = arith.constant dense<0.000000e+00> : vector<32x256xf32>
    %2 = tpu.matmul %0, %1, %cst {dimension_numbers = #tpu.dot_dimension_numbers<[1], [0], [0], [1], [0, 0, 1, 1], [], []>} : vector<32x16xf32>, vector<16x256xf32>, vector<32x256xf32> -> vector<32x256xf32>
    %c0_3 = arith.constant 0 : index
    %c0_4 = arith.constant 0 : index
    %3 = vector.load %arg2[%c0_3, %c0_4] : memref<1x256xf32, #tpu.memory_space<vmem>>, vector<1x256xf32>
    %4 = vector.broadcast %3 : vector<1x256xf32> to vector<32x256xf32>
    %5 = arith.addf %2, %4 : vector<32x256xf32>
    %cst_5 = arith.constant dense<0.000000e+00> : vector<256xf32>
    %6 = vector.multi_reduction <add>, %5, %cst_5 [0] : vector<32x256xf32> to vector<256xf32>
    %7 = vector.shape_cast %6 : vector<256xf32> to vector<1x256xf32>
    %8 = arith.mulf %5, %5 : vector<32x256xf32>
    %cst_6 = arith.constant dense<0.000000e+00> : vector<256xf32>
    %9 = vector.multi_reduction <add>, %8, %cst_6 [0] : vector<32x256xf32> to vector<256xf32>
    %10 = vector.shape_cast %9 : vector<256xf32> to vector<1x256xf32>
    %cst_7 = arith.constant 3.125000e-02 : f32
    %11 = vector.broadcast %cst_7 : f32 to vector<1x256xf32>
    %12 = arith.mulf %7, %11 : vector<1x256xf32>
    %cst_8 = arith.constant 3.125000e-02 : f32
    %13 = vector.broadcast %cst_8 : f32 to vector<1x256xf32>
    %14 = arith.mulf %10, %13 : vector<1x256xf32>
    %15 = arith.mulf %12, %12 : vector<1x256xf32>
    %16 = arith.subf %14, %15 : vector<1x256xf32>
    %cst_9 = arith.constant 0.000000e+00 : f32
    %17 = vector.broadcast %cst_9 : f32 to vector<1x256xf32>
    %18 = arith.maximumf %16, %17 : vector<1x256xf32>
    %c0_10 = arith.constant 0 : index
    %c0_11 = arith.constant 0 : index
    %19 = vector.load %arg3[%c0_10, %c0_11] : memref<1x256xf32, #tpu.memory_space<vmem>>, vector<1x256xf32>
    %cst_12 = arith.constant 9.99999974E-6 : f32
    %20 = vector.broadcast %cst_12 : f32 to vector<1x256xf32>
    %21 = arith.addf %18, %20 : vector<1x256xf32>
    %22 = math.rsqrt %21 : vector<1x256xf32>
    %23 = arith.mulf %19, %22 : vector<1x256xf32>
    %c0_13 = arith.constant 0 : index
    %c0_14 = arith.constant 0 : index
    %24 = vector.load %arg4[%c0_13, %c0_14] : memref<1x256xf32, #tpu.memory_space<vmem>>, vector<1x256xf32>
    %25 = arith.mulf %12, %23 : vector<1x256xf32>
    %26 = arith.subf %24, %25 : vector<1x256xf32>
    %27 = vector.broadcast %23 : vector<1x256xf32> to vector<32x256xf32>
    %28 = arith.mulf %5, %27 : vector<32x256xf32>
    %29 = vector.broadcast %26 : vector<1x256xf32> to vector<32x256xf32>
    %30 = arith.addf %28, %29 : vector<32x256xf32>
    %cst_15 = arith.constant 0.000000e+00 : f32
    %31 = vector.broadcast %cst_15 : f32 to vector<32x256xf32>
    %32 = arith.maximumf %30, %31 : vector<32x256xf32>
    %33 = vector.extract_strided_slice %32 {offsets = [0, 0], sizes = [32, 128], strides = [1, 1]} : vector<32x256xf32> to vector<32x128xf32>
    %34 = vector.extract_strided_slice %32 {offsets = [0, 128], sizes = [32, 128], strides = [1, 1]} : vector<32x256xf32> to vector<32x128xf32>
    %c0_16 = arith.constant 0 : index
    %c0_17 = arith.constant 0 : index
    %35 = vector.load %arg5[%c0_16, %c0_17] : memref<32x1xi32, #tpu.memory_space<vmem>>, vector<32x1xi32>
    %cst_18 = arith.constant 0.000000e+00 : f32
    %36 = vector.broadcast %cst_18 : f32 to vector<32x128xf32>
    %c0_i32 = arith.constant 0 : i32
    %37 = vector.broadcast %c0_i32 : i32 to vector<32x1xi32>
    %38 = arith.cmpi eq, %35, %37 : vector<32x1xi32>
    %cst_19 = arith.constant 0xFF800000 : f32
    %39 = vector.shape_cast %38 : vector<32x1xi1> to vector<32x1xi1>
    %40 = vector.broadcast %39 : vector<32x1xi1> to vector<32x128xi1>
    %41 = vector.broadcast %cst_19 : f32 to vector<32x128xf32>
    %42 = arith.select %40, %33, %41 : vector<32x128xi1>, vector<32x128xf32>
    %cst_20 = arith.constant dense<0xFF800000> : vector<128xf32>
    %43 = vector.multi_reduction <maximumf>, %42, %cst_20 [0] : vector<32x128xf32> to vector<128xf32>
    %44 = vector.shape_cast %43 : vector<128xf32> to vector<1x128xf32>
    %45 = vector.shape_cast %38 : vector<32x1xi1> to vector<32x1xi1>
    %46 = vector.broadcast %45 : vector<32x1xi1> to vector<32x128xi1>
    %47 = vector.shape_cast %44 : vector<1x128xf32> to vector<1x128xf32>
    %48 = vector.broadcast %47 : vector<1x128xf32> to vector<32x128xf32>
    %49 = arith.select %46, %48, %36 : vector<32x128xi1>, vector<32x128xf32>
    %c1_i32 = arith.constant 1 : i32
    %50 = vector.broadcast %c1_i32 : i32 to vector<32x1xi32>
    %51 = arith.cmpi eq, %35, %50 : vector<32x1xi32>
    %cst_21 = arith.constant 0xFF800000 : f32
    %52 = vector.shape_cast %51 : vector<32x1xi1> to vector<32x1xi1>
    %53 = vector.broadcast %52 : vector<32x1xi1> to vector<32x128xi1>
    %54 = vector.broadcast %cst_21 : f32 to vector<32x128xf32>
    %55 = arith.select %53, %33, %54 : vector<32x128xi1>, vector<32x128xf32>
    %cst_22 = arith.constant dense<0xFF800000> : vector<128xf32>
    %56 = vector.multi_reduction <maximumf>, %55, %cst_22 [0] : vector<32x128xf32> to vector<128xf32>
    %57 = vector.shape_cast %56 : vector<128xf32> to vector<1x128xf32>
    %58 = vector.shape_cast %51 : vector<32x1xi1> to vector<32x1xi1>
    %59 = vector.broadcast %58 : vector<32x1xi1> to vector<32x128xi1>
    %60 = vector.shape_cast %57 : vector<1x128xf32> to vector<1x128xf32>
    %61 = vector.broadcast %60 : vector<1x128xf32> to vector<32x128xf32>
    %62 = arith.select %59, %61, %49 : vector<32x128xi1>, vector<32x128xf32>
    %c2_i32 = arith.constant 2 : i32
    %63 = vector.broadcast %c2_i32 : i32 to vector<32x1xi32>
    %64 = arith.cmpi eq, %35, %63 : vector<32x1xi32>
    %cst_23 = arith.constant 0xFF800000 : f32
    %65 = vector.shape_cast %64 : vector<32x1xi1> to vector<32x1xi1>
    %66 = vector.broadcast %65 : vector<32x1xi1> to vector<32x128xi1>
    %67 = vector.broadcast %cst_23 : f32 to vector<32x128xf32>
    %68 = arith.select %66, %33, %67 : vector<32x128xi1>, vector<32x128xf32>
    %cst_24 = arith.constant dense<0xFF800000> : vector<128xf32>
    %69 = vector.multi_reduction <maximumf>, %68, %cst_24 [0] : vector<32x128xf32> to vector<128xf32>
    %70 = vector.shape_cast %69 : vector<128xf32> to vector<1x128xf32>
    %71 = vector.shape_cast %64 : vector<32x1xi1> to vector<32x1xi1>
    %72 = vector.broadcast %71 : vector<32x1xi1> to vector<32x128xi1>
    %73 = vector.shape_cast %70 : vector<1x128xf32> to vector<1x128xf32>
    %74 = vector.broadcast %73 : vector<1x128xf32> to vector<32x128xf32>
    %75 = arith.select %72, %74, %62 : vector<32x128xi1>, vector<32x128xf32>
    %c3_i32 = arith.constant 3 : i32
    %76 = vector.broadcast %c3_i32 : i32 to vector<32x1xi32>
    %77 = arith.cmpi eq, %35, %76 : vector<32x1xi32>
    %cst_25 = arith.constant 0xFF800000 : f32
    %78 = vector.shape_cast %77 : vector<32x1xi1> to vector<32x1xi1>
    %79 = vector.broadcast %78 : vector<32x1xi1> to vector<32x128xi1>
    %80 = vector.broadcast %cst_25 : f32 to vector<32x128xf32>
    %81 = arith.select %79, %33, %80 : vector<32x128xi1>, vector<32x128xf32>
    %cst_26 = arith.constant dense<0xFF800000> : vector<128xf32>
    %82 = vector.multi_reduction <maximumf>, %81, %cst_26 [0] : vector<32x128xf32> to vector<128xf32>
    %83 = vector.shape_cast %82 : vector<128xf32> to vector<1x128xf32>
    %84 = vector.shape_cast %77 : vector<32x1xi1> to vector<32x1xi1>
    %85 = vector.broadcast %84 : vector<32x1xi1> to vector<32x128xi1>
    %86 = vector.shape_cast %83 : vector<1x128xf32> to vector<1x128xf32>
    %87 = vector.broadcast %86 : vector<1x128xf32> to vector<32x128xf32>
    %88 = arith.select %85, %87, %75 : vector<32x128xi1>, vector<32x128xf32>
    %c4_i32 = arith.constant 4 : i32
    %89 = vector.broadcast %c4_i32 : i32 to vector<32x1xi32>
    %90 = arith.cmpi eq, %35, %89 : vector<32x1xi32>
    %cst_27 = arith.constant 0xFF800000 : f32
    %91 = vector.shape_cast %90 : vector<32x1xi1> to vector<32x1xi1>
    %92 = vector.broadcast %91 : vector<32x1xi1> to vector<32x128xi1>
    %93 = vector.broadcast %cst_27 : f32 to vector<32x128xf32>
    %94 = arith.select %92, %33, %93 : vector<32x128xi1>, vector<32x128xf32>
    %cst_28 = arith.constant dense<0xFF800000> : vector<128xf32>
    %95 = vector.multi_reduction <maximumf>, %94, %cst_28 [0] : vector<32x128xf32> to vector<128xf32>
    %96 = vector.shape_cast %95 : vector<128xf32> to vector<1x128xf32>
    %97 = vector.shape_cast %90 : vector<32x1xi1> to vector<32x1xi1>
    %98 = vector.broadcast %97 : vector<32x1xi1> to vector<32x128xi1>
    %99 = vector.shape_cast %96 : vector<1x128xf32> to vector<1x128xf32>
    %100 = vector.broadcast %99 : vector<1x128xf32> to vector<32x128xf32>
    %101 = arith.select %98, %100, %88 : vector<32x128xi1>, vector<32x128xf32>
    %c5_i32 = arith.constant 5 : i32
    %102 = vector.broadcast %c5_i32 : i32 to vector<32x1xi32>
    %103 = arith.cmpi eq, %35, %102 : vector<32x1xi32>
    %cst_29 = arith.constant 0xFF800000 : f32
    %104 = vector.shape_cast %103 : vector<32x1xi1> to vector<32x1xi1>
    %105 = vector.broadcast %104 : vector<32x1xi1> to vector<32x128xi1>
    %106 = vector.broadcast %cst_29 : f32 to vector<32x128xf32>
    %107 = arith.select %105, %33, %106 : vector<32x128xi1>, vector<32x128xf32>
    %cst_30 = arith.constant dense<0xFF800000> : vector<128xf32>
    %108 = vector.multi_reduction <maximumf>, %107, %cst_30 [0] : vector<32x128xf32> to vector<128xf32>
    %109 = vector.shape_cast %108 : vector<128xf32> to vector<1x128xf32>
    %110 = vector.shape_cast %103 : vector<32x1xi1> to vector<32x1xi1>
    %111 = vector.broadcast %110 : vector<32x1xi1> to vector<32x128xi1>
    %112 = vector.shape_cast %109 : vector<1x128xf32> to vector<1x128xf32>
    %113 = vector.broadcast %112 : vector<1x128xf32> to vector<32x128xf32>
    %114 = arith.select %111, %113, %101 : vector<32x128xi1>, vector<32x128xf32>
    %c6_i32 = arith.constant 6 : i32
    %115 = vector.broadcast %c6_i32 : i32 to vector<32x1xi32>
    %116 = arith.cmpi eq, %35, %115 : vector<32x1xi32>
    %cst_31 = arith.constant 0xFF800000 : f32
    %117 = vector.shape_cast %116 : vector<32x1xi1> to vector<32x1xi1>
    %118 = vector.broadcast %117 : vector<32x1xi1> to vector<32x128xi1>
    %119 = vector.broadcast %cst_31 : f32 to vector<32x128xf32>
    %120 = arith.select %118, %33, %119 : vector<32x128xi1>, vector<32x128xf32>
    %cst_32 = arith.constant dense<0xFF800000> : vector<128xf32>
    %121 = vector.multi_reduction <maximumf>, %120, %cst_32 [0] : vector<32x128xf32> to vector<128xf32>
    %122 = vector.shape_cast %121 : vector<128xf32> to vector<1x128xf32>
    %123 = vector.shape_cast %116 : vector<32x1xi1> to vector<32x1xi1>
    %124 = vector.broadcast %123 : vector<32x1xi1> to vector<32x128xi1>
    %125 = vector.shape_cast %122 : vector<1x128xf32> to vector<1x128xf32>
    %126 = vector.broadcast %125 : vector<1x128xf32> to vector<32x128xf32>
    %127 = arith.select %124, %126, %114 : vector<32x128xi1>, vector<32x128xf32>
    %c7_i32 = arith.constant 7 : i32
    %128 = vector.broadcast %c7_i32 : i32 to vector<32x1xi32>
    %129 = arith.cmpi eq, %35, %128 : vector<32x1xi32>
    %cst_33 = arith.constant 0xFF800000 : f32
    %130 = vector.shape_cast %129 : vector<32x1xi1> to vector<32x1xi1>
    %131 = vector.broadcast %130 : vector<32x1xi1> to vector<32x128xi1>
    %132 = vector.broadcast %cst_33 : f32 to vector<32x128xf32>
    %133 = arith.select %131, %33, %132 : vector<32x128xi1>, vector<32x128xf32>
    %cst_34 = arith.constant dense<0xFF800000> : vector<128xf32>
    %134 = vector.multi_reduction <maximumf>, %133, %cst_34 [0] : vector<32x128xf32> to vector<128xf32>
    %135 = vector.shape_cast %134 : vector<128xf32> to vector<1x128xf32>
    %136 = vector.shape_cast %129 : vector<32x1xi1> to vector<32x1xi1>
    %137 = vector.broadcast %136 : vector<32x1xi1> to vector<32x128xi1>
    %138 = vector.shape_cast %135 : vector<1x128xf32> to vector<1x128xf32>
    %139 = vector.broadcast %138 : vector<1x128xf32> to vector<32x128xf32>
    %140 = arith.select %137, %139, %127 : vector<32x128xi1>, vector<32x128xf32>
    %c0_35 = arith.constant 0 : index
    %c0_36 = arith.constant 0 : index
    %141 = vector.load %arg7[%c0_35, %c0_36] : memref<32x256xf32, #tpu.memory_space<vmem>>, vector<32x128xf32>
    tpu.vector_store %arg7[%c0_35, %c0_36], %140 {strides = array<i32>} : memref<32x256xf32, #tpu.memory_space<vmem>>, vector<32x128xf32>,
    %c0_37 = arith.constant 0 : index
    %c0_38 = arith.constant 0 : index
    %142 = vector.load %arg6[%c0_37, %c0_38] : memref<32x1xi32, #tpu.memory_space<vmem>>, vector<32x1xi32>
    %cst_39 = arith.constant 0.000000e+00 : f32
    %143 = vector.broadcast %cst_39 : f32 to vector<32x128xf32>
    %c0_i32_40 = arith.constant 0 : i32
    %144 = vector.broadcast %c0_i32_40 : i32 to vector<32x1xi32>
    %145 = arith.cmpi eq, %142, %144 : vector<32x1xi32>
    %cst_41 = arith.constant 0xFF800000 : f32
    %146 = vector.shape_cast %145 : vector<32x1xi1> to vector<32x1xi1>
    %147 = vector.broadcast %146 : vector<32x1xi1> to vector<32x128xi1>
    %148 = vector.broadcast %cst_41 : f32 to vector<32x128xf32>
    %149 = arith.select %147, %34, %148 : vector<32x128xi1>, vector<32x128xf32>
    %cst_42 = arith.constant dense<0xFF800000> : vector<128xf32>
    %150 = vector.multi_reduction <maximumf>, %149, %cst_42 [0] : vector<32x128xf32> to vector<128xf32>
    %151 = vector.shape_cast %150 : vector<128xf32> to vector<1x128xf32>
    %152 = vector.shape_cast %145 : vector<32x1xi1> to vector<32x1xi1>
    %153 = vector.broadcast %152 : vector<32x1xi1> to vector<32x128xi1>
    %154 = vector.shape_cast %151 : vector<1x128xf32> to vector<1x128xf32>
    %155 = vector.broadcast %154 : vector<1x128xf32> to vector<32x128xf32>
    %156 = arith.select %153, %155, %143 : vector<32x128xi1>, vector<32x128xf32>
    %c1_i32_43 = arith.constant 1 : i32
    %157 = vector.broadcast %c1_i32_43 : i32 to vector<32x1xi32>
    %158 = arith.cmpi eq, %142, %157 : vector<32x1xi32>
    %cst_44 = arith.constant 0xFF800000 : f32
    %159 = vector.shape_cast %158 : vector<32x1xi1> to vector<32x1xi1>
    %160 = vector.broadcast %159 : vector<32x1xi1> to vector<32x128xi1>
    %161 = vector.broadcast %cst_44 : f32 to vector<32x128xf32>
    %162 = arith.select %160, %34, %161 : vector<32x128xi1>, vector<32x128xf32>
    %cst_45 = arith.constant dense<0xFF800000> : vector<128xf32>
    %163 = vector.multi_reduction <maximumf>, %162, %cst_45 [0] : vector<32x128xf32> to vector<128xf32>
    %164 = vector.shape_cast %163 : vector<128xf32> to vector<1x128xf32>
    %165 = vector.shape_cast %158 : vector<32x1xi1> to vector<32x1xi1>
    %166 = vector.broadcast %165 : vector<32x1xi1> to vector<32x128xi1>
    %167 = vector.shape_cast %164 : vector<1x128xf32> to vector<1x128xf32>
    %168 = vector.broadcast %167 : vector<1x128xf32> to vector<32x128xf32>
    %169 = arith.select %166, %168, %156 : vector<32x128xi1>, vector<32x128xf32>
    %c0_46 = arith.constant 0 : index
    %c128 = arith.constant 128 : index
    %170 = vector.load %arg7[%c0_46, %c128] : memref<32x256xf32, #tpu.memory_space<vmem>>, vector<32x128xf32>
    tpu.vector_store %arg7[%c0_46, %c128], %169 {strides = array<i32>} : memref<32x256xf32, #tpu.memory_space<vmem>>, vector<32x128xf32>,
    return
  }
}

</mosaic_0001>

<llo_original>
// kernel: tpu_custom_call.1
$region0: #{tpu_custom_call.1}
  #allocation0 [shape = 'u32[]', space=smem, size = 0x4, offset = 0x4, fixed_abs, tag = 'smem constant byte address 0x4 - core index']
  #allocation1 [shape = 'u32[144,128]{1,0:T(1,128)}', space=vmem, size = 0x12000, scoped, tag = 'internal scratch']
  %s0 = inlined_call_operand.vmem [shape: f32[32,16], index: 0, kind: input, shape index: {}]
  %s1 = inlined_call_operand.vmem [shape: f32[16,256], index: 1, kind: input, shape index: {}]
  %s2 = inlined_call_operand.vmem [shape: f32[1,256], index: 2, kind: input, shape index: {}]
  %s3 = inlined_call_operand.vmem [shape: f32[1,256], index: 3, kind: input, shape index: {}]
  %s4 = inlined_call_operand.vmem [shape: f32[1,256], index: 4, kind: input, shape index: {}]
  %s5 = inlined_call_operand.vmem [shape: s32[32,1], index: 5, kind: input, shape index: {}]
  %s6 = inlined_call_operand.vmem [shape: s32[32,1], index: 6, kind: input, shape index: {}]
  %s7 = inlined_call_operand.hbm [shape: f32[32,256], index: 7, kind: output, shape index: {}]
  %s8 = sld [smem:[#allocation0]]
  $region38: #{tpu_custom_call.1} parent=0
    _
  %s10 = ssub.s32 1, %s8
  %s11 = scalar_select 0, %s10, %s8
  $region1: #{tpu_custom_call.1} parent=0
    #allocation2 [shape = 'u8[32768]{0}', space=vmem, size = 0x8000, scoped, tag = 'output window, operand 0, single buffered']
    #allocation3 [shape = 's32[1]{0}', space=sflag, size = 0x4, scoped, tag = 'scoped memory for tpu_custom_call.1']
    %12 = vsyncpa [#allocation3], 0
    // Predicated region
    $region2: #{tpu_custom_call.1} parent=1 // pred_check
      _
    $region3: #{tpu_custom_call.1} parent=1 // pred_check_branch
      %14 = sbr.rel (0) target = $region5
    $region4: #{tpu_custom_call.1} parent=1 // pred_region
      _
    $region5: #{tpu_custom_call.1} parent=1 // pred_fallthru
      _
    // Predicated region
    $region6: #{tpu_custom_call.1} parent=1 // pred_check
      _
    $region7: #{tpu_custom_call.1} parent=1 // pred_check_branch
      %16 = sbr.rel (0) target = $region9
    $region8: #{tpu_custom_call.1} parent=1 // pred_region
      _
    $region9: #{tpu_custom_call.1} parent=1 // pred_fallthru
      _
    // Predicated region
    $region10: #{tpu_custom_call.1} parent=1 // pred_check
      _
    $region11: #{tpu_custom_call.1} parent=1 // pred_check_branch
      %18 = sbr.rel (0) target = $region13
    $region12: #{tpu_custom_call.1} parent=1 // pred_region
      _
    $region13: #{tpu_custom_call.1} parent=1 // pred_fallthru
      _
    // Predicated region
    $region14: #{tpu_custom_call.1} parent=1 // pred_check
      _
    $region15: #{tpu_custom_call.1} parent=1 // pred_check_branch
      %20 = sbr.rel (0) target = $region17
    $region16: #{tpu_custom_call.1} parent=1 // pred_region
      _
    $region17: #{tpu_custom_call.1} parent=1 // pred_fallthru
      _
    // Predicated region
    $region18: #{tpu_custom_call.1} parent=1 // pred_check
      _
    $region19: #{tpu_custom_call.1} parent=1 // pred_check_branch
      %22 = sbr.rel (0) target = $region21
    $region20: #{tpu_custom_call.1} parent=1 // pred_region
      _
    $region21: #{tpu_custom_call.1} parent=1 // pred_fallthru
      _
    // Predicated region
    $region22: #{tpu_custom_call.1} parent=1 // pred_check
      _
    $region23: #{tpu_custom_call.1} parent=1 // pred_check_branch
      %24 = sbr.rel (0) target = $region25
    $region24: #{tpu_custom_call.1} parent=1 // pred_region
      _
    $region25: #{tpu_custom_call.1} parent=1 // pred_fallthru
      _
    // Predicated region
    $region26: #{tpu_custom_call.1} parent=1 // pred_check
      _
    $region27: #{tpu_custom_call.1} parent=1 // pred_check_branch
      %26 = sbr.rel (0) target = $region29
    $region28: #{tpu_custom_call.1} parent=1 // pred_region
      _
    $region29: #{tpu_custom_call.1} parent=1 // pred_fallthru
      _
    %v27 = vld [vmem:[%s0] sm:$0xff]
    %v28 = vld [vmem:[%s0 + $0x8] sm:$0xff]
    %v29 = vld [vmem:[%s0 + $0x10] sm:$0xff]
    %v30 = vld [vmem:[%s0 + $0x18] sm:$0xff]
    %v31 = vld [vmem:[%s1] sm:$0xff]
    %v32 = vld [vmem:[%s1 + $0x8] sm:$0xff]
    %v33 = vld [vmem:[%s1 + $0x10] sm:$0xff]
    %v34 = vld [vmem:[%s1 + $0x18] sm:$0xff]
    %v35 = vld [vmem:[%s2] sm:$0x3]
    %v37 = vlaneseq
    %v38 = vshrl.u32 %v37, 7
    %v39 = vsub.s32 0, %v38
    %v40 = vrot.slane %v35, %v39
    %v41 = vlaneseq
    %v42 = vshrl.u32 %v41, 7
    %v43 = vsub.s32 1, %v42
    %v44 = vrot.slane %v35, %v43
    %vm47 = vcmask 130048
    %v49 = vsel %vm47, %v27, 0
    %v52 = vsel %vm47, %v28, 0
    %v55 = vsel %vm47, %v29, 0
    %v58 = vsel %vm47, %v30, 0
    %60 = vmatprep.subr.mxu0 0.0
    %61 = vmatpush1.msra.mxu0 0.0
    %62 = vmatprep.subr.mxu0 0.0
    %63 = vmatpush1.msra.mxu0 0.0
    %64 = vmatprep.subr.mxu0 0.0
    %65 = vmatpush1.msra.mxu0 0.0
    %66 = vmatprep.subr.mxu0 0.0
    %67 = vmatpush1.msra.mxu0 0.0
    %68 = vmatprep.subr.mxu0 0.0
    %69 = vmatpush1.msra.mxu0 0.0
    %70 = vmatprep.subr.mxu0 0.0
    %71 = vmatpush1.msra.mxu0 0.0
    %72 = vmatprep.subr.mxu0 0.0
    %73 = vmatpush1.msra.mxu0 0.0
    %74 = vmatprep.subr.mxu0 0.0
    %75 = vmatpush1.msra.mxu0 0.0
    %76 = vmatprep.subr.mxu0 0.0
    %77 = vmatpush1.msra.mxu0 0.0
    %78 = vmatprep.subr.mxu0 0.0
    %79 = vmatpush1.msra.mxu0 0.0
    %80 = vmatprep.subr.mxu0 0.0
    %81 = vmatpush1.msra.mxu0 0.0
    %82 = vmatprep.subr.mxu0 0.0
    %83 = vmatpush1.msra.mxu0 0.0
    %84 = vmatprep.subr.mxu0 0.0
    %85 = vmatpush1.msra.mxu0 0.0
    %86 = vmatprep.subr.mxu0 0.0
    %87 = vmatpush1.msra.mxu0 0.0
    %88 = vmatprep.subr.mxu0 %v34
    %89 = vmatpush1.msra.mxu0 %v33
    %90 = vmatprep.subr.mxu0 %v32
    %91 = vmatpush1.msra.mxu0 %v31
    %92 = vmatprep.subr.mxu0 0.0
    %93 = vmatpush2.msra.mxu0 0.0
    %94 = vmatprep.subr.mxu0 0.0
    %95 = vmatpush2.msra.mxu0 0.0
    %96 = vmatprep.subr.mxu0 0.0
    %97 = vmatpush2.msra.mxu0 0.0
    %98 = vmatprep.subr.mxu0 0.0
    %99 = vmatpush2.msra.mxu0 0.0
    %100 = vmatprep.subr.mxu0 0.0
    %101 = vmatpush2.msra.mxu0 0.0
    %102 = vmatprep.subr.mxu0 0.0
    %103 = vmatpush2.msra.mxu0 0.0
    %104 = vmatprep.subr.mxu0 0.0
    %105 = vmatpush2.msra.mxu0 0.0
    %106 = vmatprep.subr.mxu0 0.0
    %107 = vmatpush2.msra.mxu0 0.0
    %108 = vmatprep.subr.mxu0 0.0
    %109 = vmatpush2.msra.mxu0 0.0
    %110 = vmatprep.subr.mxu0 0.0
    %111 = vmatpush2.msra.mxu0 0.0
    %112 = vmatprep.subr.mxu0 0.0
    %113 = vmatpush2.msra.mxu0 0.0
    %114 = vmatprep.subr.mxu0 0.0
    %115 = vmatpush2.msra.mxu0 0.0
    %116 = vmatprep.subr.mxu0 0.0
    %117 = vmatpush2.msra.mxu0 0.0
    %118 = vmatprep.subr.mxu0 0.0
    %119 = vmatpush2.msra.mxu0 0.0
    %120 = vmatprep.subr.mxu0 0.0
    %121 = vmatpush2.msra.mxu0 0.0
    %122 = vmatprep.subr.mxu0 0.0
    %123 = vmatpush2.msra.mxu0 0.0
    %124 = vmatprep.mubr.f32.mxu0 0.0
    %125 = vmatmul.mubr.f32.gmra.mxu0 %v49
    %v126 = vpop.f32.mrf.mxu0
    %v127 = vadd.f32 %v40, %v126
    %v128 = vpop.f32.mrf.mxu0
    %v129 = vadd.f32 %v44, %v128
    %130 = vmatprep.mubr.f32.mxu0 0.0
    %131 = vmatmul.mubr.f32.gmra.mxu0 %v52
    %v132 = vpop.f32.mrf.mxu0
    %v133 = vadd.f32 %v40, %v132
    %v134 = vpop.f32.mrf.mxu0
    %v135 = vadd.f32 %v44, %v134
    %136 = vmatprep.mubr.f32.mxu0 0.0
    %137 = vmatmul.mubr.f32.gmra.mxu0 %v55
    %v138 = vpop.f32.mrf.mxu0
    %v139 = vadd.f32 %v40, %v138
    %v140 = vpop.f32.mrf.mxu0
    %v141 = vadd.f32 %v44, %v140
    %142 = vmatprep.mubr.f32.mxu0 0.0
    %143 = vmatmul.mubr.f32.gmra.mxu0 %v58
    %v144 = vpop.f32.mrf.mxu0
    %v145 = vadd.f32 %v40, %v144
    %v146 = vpop.f32.mrf.mxu0
    %v147 = vadd.f32 %v44, %v146
    %148 = vdwg.mxu0
    %v149 = vadd.f32 %v127, %v133
    %v150 = vadd.f32 %v149, %v139
    %v151 = vadd.f32 %v150, %v145
    %v152 = vrot.slane %v151, 4
    %v153 = vadd.f32 %v151, %v152
    %v154 = vrot.slane %v153, 2
    %v155 = vadd.f32 %v153, %v154
    %v156 = vrot.slane %v155, 1
    %v157 = vadd.f32 %v155, %v156
    %v158 = vadd.f32 %v129, %v135
    %v159 = vadd.f32 %v158, %v141
    %v160 = vadd.f32 %v159, %v147
    %v161 = vrot.slane %v160, 4
    %v162 = vadd.f32 %v160, %v161
    %v163 = vrot.slane %v162, 2
    %v164 = vadd.f32 %v162, %v163
    %v165 = vrot.slane %v164, 1
    %v166 = vadd.f32 %v164, %v165
    %v167 = vmul.f32 %v127, %v127
    %v168 = vmul.f32 %v129, %v129
    %v169 = vmul.f32 %v133, %v133
    %v170 = vmul.f32 %v135, %v135
    %v171 = vmul.f32 %v139, %v139
    %v172 = vmul.f32 %v141, %v141
    %v173 = vmul.f32 %v145, %v145
    %v174 = vmul.f32 %v147, %v147
    %v175 = vadd.f32 %v167, %v169
    %v176 = vadd.f32 %v175, %v171
    %v177 = vadd.f32 %v176, %v173
    %v178 = vrot.slane %v177, 4
    %v179 = vadd.f32 %v177, %v178
    %v180 = vrot.slane %v179, 2
    %v181 = vadd.f32 %v179, %v180
    %v182 = vrot.slane %v181, 1
    %v183 = vadd.f32 %v181, %v182
    %v184 = vadd.f32 %v168, %v170
    %v185 = vadd.f32 %v184, %v172
    %v186 = vadd.f32 %v185, %v174
    %v187 = vrot.slane %v186, 4
    %v188 = vadd.f32 %v186, %v187
    %v189 = vrot.slane %v188, 2
    %v190 = vadd.f32 %v188, %v189
    %v191 = vrot.slane %v190, 1
    %v192 = vadd.f32 %v190, %v191
    %v193 = vmul.f32 %v157, 0.03125
    %v194 = vmul.f32 %v166, 0.03125
    %v195 = vmul.f32 %v183, 0.03125
    %v196 = vmul.f32 %v192, 0.03125
    %v197 = vmul.f32 %v193, %v193
    %v198 = vmul.f32 %v194, %v194
    %v199 = vsub.f32 %v195, %v197
    %v200 = vsub.f32 %v196, %v198
    %v201 = vmax.f32 %v199, 0.0
    %v202 = vmax.f32 %v200, 0.0
    %v203 = vld [vmem:[%s3] sm:$0x3]
    %v204 = vadd.f32 %v201, 1e-05
    %v205 = vadd.f32 %v202, 1e-05
    %v206 = vrsqrt.pop %v204
    %v207 = vrsqrt.pop %v205
    %v210 = vcombine.low %v206, %v207
    %v212 = vunpack.c.l.s4 1966171168
    %v213 = vunpack.c.0.s8 %v212
    %v214 = vlaneseq
    %v215 = vshrl.u32 %v214, 7
    %v216 = vsub.s32 %v213, %v215
    %v217 = vrot.slane %v210, %v216
    %v219 = vunpack.c.l.s4 1966171168
    %v220 = vunpack.c.0.s8 %v219
    %v221 = vlaneseq
    %v222 = vshrl.u32 %v221, 7
    %v223 = vsub.s32 %v220, %v222
    %v224 = vrot.slane %v217, %v223
    %v226 = vmul.f32 %v203, %v224
    %v227 = vld [vmem:[%s4] sm:$0x3]
    %v229 = vlaneseq
    %v230 = vshrl.u32 %v229, 7
    %v231 = vsub.s32 0, %v230
    %v232 = vrot.slane %v226, %v231
    %v233 = vlaneseq
    %v234 = vshrl.u32 %v233, 7
    %v235 = vsub.s32 1, %v234
    %v236 = vrot.slane %v226, %v235
    %v239 = vmul.f32 %v193, %v232
    %v240 = vmul.f32 %v194, %v236
    %v243 = vcombine.low %v239, %v240
    %v245 = vunpack.c.l.s4 1966171168
    %v246 = vunpack.c.0.s8 %v245
    %v247 = vlaneseq
    %v248 = vshrl.u32 %v247, 7
    %v249 = vsub.s32 %v246, %v248
    %v250 = vrot.slane %v243, %v249
    %v252 = vunpack.c.l.s4 1966171168
    %v253 = vunpack.c.0.s8 %v252
    %v254 = vlaneseq
    %v255 = vshrl.u32 %v254, 7
    %v256 = vsub.s32 %v253, %v255
    %v257 = vrot.slane %v250, %v256
    %v259 = vsub.f32 %v227, %v257
    %v260 = vmul.f32 %v127, %v232
    %v261 = vmul.f32 %v129, %v236
    %v262 = vmul.f32 %v133, %v232
    %v263 = vmul.f32 %v135, %v236
    %v264 = vmul.f32 %v139, %v232
    %v265 = vmul.f32 %v141, %v236
    %v266 = vmul.f32 %v145, %v232
    %v267 = vmul.f32 %v147, %v236
    %v269 = vlaneseq
    %v270 = vshrl.u32 %v269, 7
    %v271 = vsub.s32 0, %v270
    %v272 = vrot.slane %v259, %v271
    %v273 = vlaneseq
    %v274 = vshrl.u32 %v273, 7
    %v275 = vsub.s32 1, %v274
    %v276 = vrot.slane %v259, %v275
    %v279 = vadd.f32 %v260, %v272
    %v280 = vadd.f32 %v261, %v276
    %v281 = vadd.f32 %v262, %v272
    %v282 = vadd.f32 %v263, %v276
    %v283 = vadd.f32 %v264, %v272
    %v284 = vadd.f32 %v265, %v276
    %v285 = vadd.f32 %v266, %v272
    %v286 = vadd.f32 %v267, %v276
    %v287 = vmax.f32 %v279, 0.0
    %v288 = vmax.f32 %v280, 0.0
    %v289 = vmax.f32 %v281, 0.0
    %v290 = vmax.f32 %v282, 0.0
    %v291 = vmax.f32 %v283, 0.0
    %v292 = vmax.f32 %v284, 0.0
    %v293 = vmax.f32 %v285, 0.0
    %v294 = vmax.f32 %v286, 0.0
    %v295 = vld [vmem:[%s5] sm:$0xff]
    %v296 = vld [vmem:[%s5 + $0x8] sm:$0xff]
    %v297 = vld [vmem:[%s5 + $0x10] sm:$0xff]
    %v298 = vld [vmem:[%s5 + $0x18] sm:$0xff]
    %vm299 = vcmp.eq.s32.totalorder %v295, 0
    %vm300 = vcmp.eq.s32.totalorder %v296, 0
    %vm301 = vcmp.eq.s32.totalorder %v297, 0
    %vm302 = vcmp.eq.s32.totalorder %v298, 0
    %v303 = vsel %vm299, 1, 0
    %v304 = vsel %vm300, 1, 0
    %v305 = vsel %vm301, 1, 0
    %v306 = vsel %vm302, 1, 0
    %307 = vset.pattern.permute.xlu0 0
    %308 = vperm.xlu0 %307, %v303
    %v309 = vpop.permute.xlu0 %308
    %310 = vset.pattern.permute.xlu0 0
    %311 = vperm.xlu0 %310, %v304
    %v312 = vpop.permute.xlu0 %311
    %313 = vset.pattern.permute.xlu0 0
    %314 = vperm.xlu0 %313, %v305
    %v315 = vpop.permute.xlu0 %314
    %316 = vset.pattern.permute.xlu0 0
    %317 = vperm.xlu0 %316, %v306
    %v318 = vpop.permute.xlu0 %317
    %vm319 = vcmp.eq.s32.totalorder %v309, 1
    %vm320 = vcmp.eq.s32.totalorder %v312, 1
    %vm321 = vcmp.eq.s32.totalorder %v315, 1
    %vm322 = vcmp.eq.s32.totalorder %v318, 1
    %v323 = vsel %vm319, %v287, -inf
    %v324 = vsel %vm320, %v289, -inf
    %v325 = vsel %vm321, %v291, -inf
    %v326 = vsel %vm322, %v293, -inf
    %v327 = vmax.f32 %v323, %v324
    %v328 = vmax.f32 %v325, %v326
    %v329 = vmax.f32 %v327, %v328
    %v330 = vrot.slane %v329, 4
    %v331 = vmax.f32 %v329, %v330
    %v332 = vrot.slane %v331, 2
    %v333 = vmax.f32 %v331, %v332
    %v334 = vrot.slane %v333, 1
    %v335 = vmax.f32 %v333, %v334
    %v336 = vsel %vm319, %v335, 0.0
    %v337 = vsel %vm320, %v335, 0.0
    %v338 = vsel %vm321, %v335, 0.0
    %v339 = vsel %vm322, %v335, 0.0
    %vm340 = vcmp.eq.s32.totalorder %v295, 1
    %vm341 = vcmp.eq.s32.totalorder %v296, 1
    %vm342 = vcmp.eq.s32.totalorder %v297, 1
    %vm343 = vcmp.eq.s32.totalorder %v298, 1
    %v344 = vsel %vm340, 1, 0
    %v345 = vsel %vm341, 1, 0
    %v346 = vsel %vm342, 1, 0
    %v347 = vsel %vm343, 1, 0
    %348 = vset.pattern.permute.xlu0 0
    %349 = vperm.xlu0 %348, %v344
    %v350 = vpop.permute.xlu0 %349
    %351 = vset.pattern.permute.xlu0 0
    %352 = vperm.xlu0 %351, %v345
    %v353 = vpop.permute.xlu0 %352
    %354 = vset.pattern.permute.xlu0 0
    %355 = vperm.xlu0 %354, %v346
    %v356 = vpop.permute.xlu0 %355
    %357 = vset.pattern.permute.xlu0 0
    %358 = vperm.xlu0 %357, %v347
    %v359 = vpop.permute.xlu0 %358
    %vm360 = vcmp.eq.s32.totalorder %v350, 1
    %vm361 = vcmp.eq.s32.totalorder %v353, 1
    %vm362 = vcmp.eq.s32.totalorder %v356, 1
    %vm363 = vcmp.eq.s32.totalorder %v359, 1
    %v364 = vsel %vm360, %v287, -inf
    %v365 = vsel %vm361, %v289, -inf
    %v366 = vsel %vm362, %v291, -inf
    %v367 = vsel %vm363, %v293, -inf
    %v368 = vmax.f32 %v364, %v365
    %v369 = vmax.f32 %v366, %v367
    %v370 = vmax.f32 %v368, %v369
    %v371 = vrot.slane %v370, 4
    %v372 = vmax.f32 %v370, %v371
    %v373 = vrot.slane %v372, 2
    %v374 = vmax.f32 %v372, %v373
    %v375 = vrot.slane %v374, 1
    %v376 = vmax.f32 %v374, %v375
    %v377 = vsel %vm360, %v376, %v336
    %v378 = vsel %vm361, %v376, %v337
    %v379 = vsel %vm362, %v376, %v338
    %v380 = vsel %vm363, %v376, %v339
    %vm381 = vcmp.eq.s32.totalorder %v295, 2
    %vm382 = vcmp.eq.s32.totalorder %v296, 2
    %vm383 = vcmp.eq.s32.totalorder %v297, 2
    %vm384 = vcmp.eq.s32.totalorder %v298, 2
    %v385 = vsel %vm381, 1, 0
    %v386 = vsel %vm382, 1, 0
    %v387 = vsel %vm383, 1, 0
    %v388 = vsel %vm384, 1, 0
    %389 = vset.pattern.permute.xlu0 0
    %390 = vperm.xlu0 %389, %v385
    %v391 = vpop.permute.xlu0 %390
    %392 = vset.pattern.permute.xlu0 0
    %393 = vperm.xlu0 %392, %v386
    %v394 = vpop.permute.xlu0 %393
    %395 = vset.pattern.permute.xlu0 0
    %396 = vperm.xlu0 %395, %v387
    %v397 = vpop.permute.xlu0 %396
    %398 = vset.pattern.permute.xlu0 0
    %399 = vperm.xlu0 %398, %v388
    %v400 = vpop.permute.xlu0 %399
    %vm401 = vcmp.eq.s32.totalorder %v391, 1
    %vm402 = vcmp.eq.s32.totalorder %v394, 1
    %vm403 = vcmp.eq.s32.totalorder %v397, 1
    %vm404 = vcmp.eq.s32.totalorder %v400, 1
    %v405 = vsel %vm401, %v287, -inf
    %v406 = vsel %vm402, %v289, -inf
    %v407 = vsel %vm403, %v291, -inf
    %v408 = vsel %vm404, %v293, -inf
    %v409 = vmax.f32 %v405, %v406
    %v410 = vmax.f32 %v407, %v408
    %v411 = vmax.f32 %v409, %v410
    %v412 = vrot.slane %v411, 4
    %v413 = vmax.f32 %v411, %v412
    %v414 = vrot.slane %v413, 2
    %v415 = vmax.f32 %v413, %v414
    %v416 = vrot.slane %v415, 1
    %v417 = vmax.f32 %v415, %v416
    %v418 = vsel %vm401, %v417, %v377
    %v419 = vsel %vm402, %v417, %v378
    %v420 = vsel %vm403, %v417, %v379
    %v421 = vsel %vm404, %v417, %v380
    %vm422 = vcmp.eq.s32.totalorder %v295, 3
    %vm423 = vcmp.eq.s32.totalorder %v296, 3
    %vm424 = vcmp.eq.s32.totalorder %v297, 3
    %vm425 = vcmp.eq.s32.totalorder %v298, 3
    %v426 = vsel %vm422, 1, 0
    %v427 = vsel %vm423, 1, 0
    %v428 = vsel %vm424, 1, 0
    %v429 = vsel %vm425, 1, 0
    %430 = vset.pattern.permute.xlu0 0
    %431 = vperm.xlu0 %430, %v426
    %v432 = vpop.permute.xlu0 %431
    %433 = vset.pattern.permute.xlu0 0
    %434 = vperm.xlu0 %433, %v427
    %v435 = vpop.permute.xlu0 %434
    %436 = vset.pattern.permute.xlu0 0
    %437 = vperm.xlu0 %436, %v428
    %v438 = vpop.permute.xlu0 %437
    %439 = vset.pattern.permute.xlu0 0
    %440 = vperm.xlu0 %439, %v429
    %v441 = vpop.permute.xlu0 %440
    %vm442 = vcmp.eq.s32.totalorder %v432, 1
    %vm443 = vcmp.eq.s32.totalorder %v435, 1
    %vm444 = vcmp.eq.s32.totalorder %v438, 1
    %vm445 = vcmp.eq.s32.totalorder %v441, 1
    %v446 = vsel %vm442, %v287, -inf
    %v447 = vsel %vm443, %v289, -inf
    %v448 = vsel %vm444, %v291, -inf
    %v449 = vsel %vm445, %v293, -inf
    %v450 = vmax.f32 %v446, %v447
    %v451 = vmax.f32 %v448, %v449
    %v452 = vmax.f32 %v450, %v451
    %v453 = vrot.slane %v452, 4
    %v454 = vmax.f32 %v452, %v453
    %v455 = vrot.slane %v454, 2
    %v456 = vmax.f32 %v454, %v455
    %v457 = vrot.slane %v456, 1
    %v458 = vmax.f32 %v456, %v457
    %v459 = vsel %vm442, %v458, %v418
    %v460 = vsel %vm443, %v458, %v419
    %v461 = vsel %vm444, %v458, %v420
    %v462 = vsel %vm445, %v458, %v421
    %vm463 = vcmp.eq.s32.totalorder %v295, 4
    %vm464 = vcmp.eq.s32.totalorder %v296, 4
    %vm465 = vcmp.eq.s32.totalorder %v297, 4
    %vm466 = vcmp.eq.s32.totalorder %v298, 4
    %v467 = vsel %vm463, 1, 0
    %v468 = vsel %vm464, 1, 0
    %v469 = vsel %vm465, 1, 0
    %v470 = vsel %vm466, 1, 0
    %471 = vset.pattern.permute.xlu0 0
    %472 = vperm.xlu0 %471, %v467
    %v473 = vpop.permute.xlu0 %472
    %474 = vset.pattern.permute.xlu0 0
    %475 = vperm.xlu0 %474, %v468
    %v476 = vpop.permute.xlu0 %475
    %477 = vset.pattern.permute.xlu0 0
    %478 = vperm.xlu0 %477, %v469
    %v479 = vpop.permute.xlu0 %478
    %480 = vset.pattern.permute.xlu0 0
    %481 = vperm.xlu0 %480, %v470
    %v482 = vpop.permute.xlu0 %481
    %vm483 = vcmp.eq.s32.totalorder %v473, 1
    %vm484 = vcmp.eq.s32.totalorder %v476, 1
    %vm485 = vcmp.eq.s32.totalorder %v479, 1
    %vm486 = vcmp.eq.s32.totalorder %v482, 1
    %v487 = vsel %vm483, %v287, -inf
    %v488 = vsel %vm484, %v289, -inf
    %v489 = vsel %vm485, %v291, -inf
    %v490 = vsel %vm486, %v293, -inf
    %v491 = vmax.f32 %v487, %v488
    %v492 = vmax.f32 %v489, %v490
    %v493 = vmax.f32 %v491, %v492
    %v494 = vrot.slane %v493, 4
    %v495 = vmax.f32 %v493, %v494
    %v496 = vrot.slane %v495, 2
    %v497 = vmax.f32 %v495, %v496
    %v498 = vrot.slane %v497, 1
    %v499 = vmax.f32 %v497, %v498
    %v500 = vsel %vm483, %v499, %v459
    %v501 = vsel %vm484, %v499, %v460
    %v502 = vsel %vm485, %v499, %v461
    %v503 = vsel %vm486, %v499, %v462
    %vm504 = vcmp.eq.s32.totalorder %v295, 5
    %vm505 = vcmp.eq.s32.totalorder %v296, 5
    %vm506 = vcmp.eq.s32.totalorder %v297, 5
    %vm507 = vcmp.eq.s32.totalorder %v298, 5
    %v508 = vsel %vm504, 1, 0
    %v509 = vsel %vm505, 1, 0
    %v510 = vsel %vm506, 1, 0
    %v511 = vsel %vm507, 1, 0
    %512 = vset.pattern.permute.xlu0 0
    %513 = vperm.xlu0 %512, %v508
    %v514 = vpop.permute.xlu0 %513
    %515 = vset.pattern.permute.xlu0 0
    %516 = vperm.xlu0 %515, %v509
    %v517 = vpop.permute.xlu0 %516
    %518 = vset.pattern.permute.xlu0 0
    %519 = vperm.xlu0 %518, %v510
    %v520 = vpop.permute.xlu0 %519
    %521 = vset.pattern.permute.xlu0 0
    %522 = vperm.xlu0 %521, %v511
    %v523 = vpop.permute.xlu0 %522
    %vm524 = vcmp.eq.s32.totalorder %v514, 1
    %vm525 = vcmp.eq.s32.totalorder %v517, 1
    %vm526 = vcmp.eq.s32.totalorder %v520, 1
    %vm527 = vcmp.eq.s32.totalorder %v523, 1
    %v528 = vsel %vm524, %v287, -inf
    %v529 = vsel %vm525, %v289, -inf
    %v530 = vsel %vm526, %v291, -inf
    %v531 = vsel %vm527, %v293, -inf
    %v532 = vmax.f32 %v528, %v529
    %v533 = vmax.f32 %v530, %v531
    %v534 = vmax.f32 %v532, %v533
    %v535 = vrot.slane %v534, 4
    %v536 = vmax.f32 %v534, %v535
    %v537 = vrot.slane %v536, 2
    %v538 = vmax.f32 %v536, %v537
    %v539 = vrot.slane %v538, 1
    %v540 = vmax.f32 %v538, %v539
    %v541 = vsel %vm524, %v540, %v500
    %v542 = vsel %vm525, %v540, %v501
    %v543 = vsel %vm526, %v540, %v502
    %v544 = vsel %vm527, %v540, %v503
    %vm545 = vcmp.eq.s32.totalorder %v295, 6
    %vm546 = vcmp.eq.s32.totalorder %v296, 6
    %vm547 = vcmp.eq.s32.totalorder %v297, 6
    %vm548 = vcmp.eq.s32.totalorder %v298, 6
    %v549 = vsel %vm545, 1, 0
    %v550 = vsel %vm546, 1, 0
    %v551 = vsel %vm547, 1, 0
    %v552 = vsel %vm548, 1, 0
    %553 = vset.pattern.permute.xlu0 0
    %554 = vperm.xlu0 %553, %v549
    %v555 = vpop.permute.xlu0 %554
    %556 = vset.pattern.permute.xlu0 0
    %557 = vperm.xlu0 %556, %v550
    %v558 = vpop.permute.xlu0 %557
    %559 = vset.pattern.permute.xlu0 0
    %560 = vperm.xlu0 %559, %v551
    %v561 = vpop.permute.xlu0 %560
    %562 = vset.pattern.permute.xlu0 0
    %563 = vperm.xlu0 %562, %v552
    %v564 = vpop.permute.xlu0 %563
    %vm565 = vcmp.eq.s32.totalorder %v555, 1
    %vm566 = vcmp.eq.s32.totalorder %v558, 1
    %vm567 = vcmp.eq.s32.totalorder %v561, 1
    %vm568 = vcmp.eq.s32.totalorder %v564, 1
    %v569 = vsel %vm565, %v287, -inf
    %v570 = vsel %vm566, %v289, -inf
    %v571 = vsel %vm567, %v291, -inf
    %v572 = vsel %vm568, %v293, -inf
    %v573 = vmax.f32 %v569, %v570
    %v574 = vmax.f32 %v571, %v572
    %v575 = vmax.f32 %v573, %v574
    %v576 = vrot.slane %v575, 4
    %v577 = vmax.f32 %v575, %v576
    %v578 = vrot.slane %v577, 2
    %v579 = vmax.f32 %v577, %v578
    %v580 = vrot.slane %v579, 1
    %v581 = vmax.f32 %v579, %v580
    %v582 = vsel %vm565, %v581, %v541
    %v583 = vsel %vm566, %v581, %v542
    %v584 = vsel %vm567, %v581, %v543
    %v585 = vsel %vm568, %v581, %v544
    %vm586 = vcmp.eq.s32.totalorder %v295, 7
    %vm587 = vcmp.eq.s32.totalorder %v296, 7
    %vm588 = vcmp.eq.s32.totalorder %v297, 7
    %vm589 = vcmp.eq.s32.totalorder %v298, 7
    %v590 = vsel %vm586, 1, 0
    %v591 = vsel %vm587, 1, 0
    %v592 = vsel %vm588, 1, 0
    %v593 = vsel %vm589, 1, 0
    %594 = vset.pattern.permute.xlu0 0
    %595 = vperm.xlu0 %594, %v590
    %v596 = vpop.permute.xlu0 %595
    %597 = vset.pattern.permute.xlu0 0
    %598 = vperm.xlu0 %597, %v591
    %v599 = vpop.permute.xlu0 %598
    %600 = vset.pattern.permute.xlu0 0
    %601 = vperm.xlu0 %600, %v592
    %v602 = vpop.permute.xlu0 %601
    %603 = vset.pattern.permute.xlu0 0
    %604 = vperm.xlu0 %603, %v593
    %v605 = vpop.permute.xlu0 %604
    %vm606 = vcmp.eq.s32.totalorder %v596, 1
    %vm607 = vcmp.eq.s32.totalorder %v599, 1
    %vm608 = vcmp.eq.s32.totalorder %v602, 1
    %vm609 = vcmp.eq.s32.totalorder %v605, 1
    %v610 = vsel %vm606, %v287, -inf
    %v611 = vsel %vm607, %v289, -inf
    %v612 = vsel %vm608, %v291, -inf
    %v613 = vsel %vm609, %v293, -inf
    %v614 = vmax.f32 %v610, %v611
    %v615 = vmax.f32 %v612, %v613
    %v616 = vmax.f32 %v614, %v615
    %v617 = vrot.slane %v616, 4
    %v618 = vmax.f32 %v616, %v617
    %v619 = vrot.slane %v618, 2
    %v620 = vmax.f32 %v618, %v619
    %v621 = vrot.slane %v620, 1
    %v622 = vmax.f32 %v620, %v621
    %v623 = vsel %vm606, %v622, %v582
    %v624 = vsel %vm607, %v622, %v583
    %v625 = vsel %vm608, %v622, %v584
    %v626 = vsel %vm609, %v622, %v585
    %627 = vst [vmem:[#allocation2] sm:$0xff] %v623
    %628 = vst [vmem:[#allocation2 + $0x10] sm:$0xff] %v624
    %629 = vst [vmem:[#allocation2 + $0x20] sm:$0xff] %v625
    %630 = vst [vmem:[#allocation2 + $0x30] sm:$0xff] %v626
    %v631 = vld [vmem:[%s6] sm:$0xff]
    %v632 = vld [vmem:[%s6 + $0x8] sm:$0xff]
    %v633 = vld [vmem:[%s6 + $0x10] sm:$0xff]
    %v634 = vld [vmem:[%s6 + $0x18] sm:$0xff]
    %vm635 = vcmp.eq.s32.totalorder %v631, 0
    %vm636 = vcmp.eq.s32.totalorder %v632, 0
    %vm637 = vcmp.eq.s32.totalorder %v633, 0
    %vm638 = vcmp.eq.s32.totalorder %v634, 0
    %v639 = vsel %vm635, 1, 0
    %v640 = vsel %vm636, 1, 0
    %v641 = vsel %vm637, 1, 0
    %v642 = vsel %vm638, 1, 0
    %643 = vset.pattern.permute.xlu0 0
    %644 = vperm.xlu0 %643, %v639
    %v645 = vpop.permute.xlu0 %644
    %646 = vset.pattern.permute.xlu0 0
    %647 = vperm.xlu0 %646, %v640
    %v648 = vpop.permute.xlu0 %647
    %649 = vset.pattern.permute.xlu0 0
    %650 = vperm.xlu0 %649, %v641
    %v651 = vpop.permute.xlu0 %650
    %652 = vset.pattern.permute.xlu0 0
    %653 = vperm.xlu0 %652, %v642
    %v654 = vpop.permute.xlu0 %653
    %vm655 = vcmp.eq.s32.totalorder %v645, 1
    %vm656 = vcmp.eq.s32.totalorder %v648, 1
    %vm657 = vcmp.eq.s32.totalorder %v651, 1
    %vm658 = vcmp.eq.s32.totalorder %v654, 1
    %v659 = vsel %vm655, %v288, -inf
    %v660 = vsel %vm656, %v290, -inf
    %v661 = vsel %vm657, %v292, -inf
    %v662 = vsel %vm658, %v294, -inf
    %v663 = vmax.f32 %v659, %v660
    %v664 = vmax.f32 %v661, %v662
    %v665 = vmax.f32 %v663, %v664
    %v666 = vrot.slane %v665, 4
    %v667 = vmax.f32 %v665, %v666
    %v668 = vrot.slane %v667, 2
    %v669 = vmax.f32 %v667, %v668
    %v670 = vrot.slane %v669, 1
    %v671 = vmax.f32 %v669, %v670
    %v672 = vsel %vm655, %v671, 0.0
    %v673 = vsel %vm656, %v671, 0.0
    %v674 = vsel %vm657, %v671, 0.0
    %v675 = vsel %vm658, %v671, 0.0
    %vm676 = vcmp.eq.s32.totalorder %v631, 1
    %vm677 = vcmp.eq.s32.totalorder %v632, 1
    %vm678 = vcmp.eq.s32.totalorder %v633, 1
    %vm679 = vcmp.eq.s32.totalorder %v634, 1
    %v680 = vsel %vm676, 1, 0
    %v681 = vsel %vm677, 1, 0
    %v682 = vsel %vm678, 1, 0
    %v683 = vsel %vm679, 1, 0
    %684 = vset.pattern.permute.xlu0 0
    %685 = vperm.xlu0 %684, %v680
    %v686 = vpop.permute.xlu0 %685
    %687 = vset.pattern.permute.xlu0 0
    %688 = vperm.xlu0 %687, %v681
    %v689 = vpop.permute.xlu0 %688
    %690 = vset.pattern.permute.xlu0 0
    %691 = vperm.xlu0 %690, %v682
    %v692 = vpop.permute.xlu0 %691
    %693 = vset.pattern.permute.xlu0 0
    %694 = vperm.xlu0 %693, %v683
    %v695 = vpop.permute.xlu0 %694
    %vm696 = vcmp.eq.s32.totalorder %v686, 1
    %vm697 = vcmp.eq.s32.totalorder %v689, 1
    %vm698 = vcmp.eq.s32.totalorder %v692, 1
    %vm699 = vcmp.eq.s32.totalorder %v695, 1
    %v700 = vsel %vm696, %v288, -inf
    %v701 = vsel %vm697, %v290, -inf
    %v702 = vsel %vm698, %v292, -inf
    %v703 = vsel %vm699, %v294, -inf
    %v704 = vmax.f32 %v700, %v701
    %v705 = vmax.f32 %v702, %v703
    %v706 = vmax.f32 %v704, %v705
    %v707 = vrot.slane %v706, 4
    %v708 = vmax.f32 %v706, %v707
    %v709 = vrot.slane %v708, 2
    %v710 = vmax.f32 %v708, %v709
    %v711 = vrot.slane %v710, 1
    %v712 = vmax.f32 %v710, %v711
    %v713 = vsel %vm696, %v712, %v672
    %v714 = vsel %vm697, %v712, %v673
    %v715 = vsel %vm698, %v712, %v674
    %v716 = vsel %vm699, %v712, %v675
    %717 = vst [vmem:[#allocation2 + $0x8] sm:$0xff] %v713
    %718 = vst [vmem:[#allocation2 + $0x18] sm:$0xff] %v714
    %719 = vst [vmem:[#allocation2 + $0x28] sm:$0xff] %v715
    %720 = vst [vmem:[#allocation2 + $0x38] sm:$0xff] %v716
    // Predicated region
    $region30: #{tpu_custom_call.1} parent=1 // pred_check
      _
    $region31: #{tpu_custom_call.1} parent=1 // pred_check_branch
      %722 = sbr.rel (0) target = $region33
    $region32: #{tpu_custom_call.1} parent=1 // pred_region
      %s724 = ssub.s32 1024, 1024
      %725 = vsyncadd [#allocation3], %s724
      %s726 = sshll.u32 [#allocation2], 4
      %s727 = int_to_ptr.vmem [resolvable:$true] %s726
      %732 = dma.vmem_to_hbm [thread:$0]  %s727, 1024, %s7, [#allocation3], 256, 256, 16
    $region33: #{tpu_custom_call.1} parent=1 // pred_fallthru
      _
    // Predicated region
    $region34: #{tpu_custom_call.1} parent=1 // pred_check
      _
    $region35: #{tpu_custom_call.1} parent=1 // pred_check_branch
      %734 = sbr.rel (0) target = $region37
    $region36: #{tpu_custom_call.1} parent=1 // pred_region
      %735 = dma.done [#allocation3], 1024
    $region37: #{tpu_custom_call.1} parent=1 // pred_fallthru
      _
    %736 = vsyncpa [#allocation3], 1

</llo_original>
